<compile_context>
chip_gen: v7x
topology: tpu7x:2x2x1
jax: 0.10.0
libtpu: 0.0.40
codegen_flags: <defaults>
</compile_context>

<pallas_src>
import jax
import jax.numpy as jnp
from jax.experimental import pallas as pl
from jax.experimental.pallas import tpu as pltpu


# Widest multiple of 128 that divides the element count wins: lane-dense slab,
# wide unmasked vst / DMA streams.
_LANE_CHOICES = (8192, 4096, 2048, 1024, 512, 256, 128)

# ~4 MiB per block (~86% of HBM roofline for mem-bound elementwise vs ~85% at
# 1 MiB; amortizes the ~0.35 us per-grid-step overhead).  Double-buffered
# in+out = 16 MiB of VMEM, so raise the scoped-VMEM limit explicitly for v5e
# (16 MiB default); v6e/v7x default is already 32 MiB.
_BLOCK_BYTES_TARGET = 4 << 20
_VMEM_LIMIT_BYTES = 32 << 20

_BIG_THRESH = 1e18                       # above this, ax*ax would overflow f32
_F32_MAX = 3.4028234663852886e38
_SIGN_MASK = 0x80000000


def _asinh_kernel(x_ref, o_ref):
    # Load in the stored dtype (keeps HBM traffic narrow for bf16); widen to
    # f32 in-register for the math only.
    x = x_ref[...].astype(jnp.float32)
    ax = jnp.abs(x)
    t = ax * ax
    s = jnp.sqrt(t + 1.0)

    # asinh(ax) = log1p(ax + ax^2 / (1 + sqrt(ax^2 + 1))).  Since
    # ax^2 / (1 + s) == s - 1 exactly, the divide disappears: the only EUP ops
    # left are sqrt and log1p (2 transcendentals / element).
    u_small = ax + (s - 1.0)

    # Huge |x| (ax^2 overflows f32): asinh(ax) ~= log(2*ax) == log1p(2*ax) to
    # f32 precision.  Clamp so 2*ax never becomes inf (result stays finite and
    # matches torch up to f32 max).  The where picks the log1p ARGUMENT, so a
    # single fused log1p serves both branches.
    u_big = jnp.minimum(2.0 * ax, jnp.float32(_F32_MAX))
    u = jnp.where(ax > jnp.float32(_BIG_THRESH), u_big, u_small)
    y = jnp.log1p(u)
    y = jnp.where(jnp.isinf(ax), ax, y)          # asinh(+-inf) = +-inf exactly

    # Restore the sign with a sign-bit OR: preserves -0.0 (unlike an x<0
    # select) and avoids the compare/negate/select chain.  y >= 0 always.
    sign = pltpu.bitcast(x, jnp.uint32) & jnp.uint32(_SIGN_MASK)
    y_signed = pltpu.bitcast(pltpu.bitcast(y, jnp.uint32) | sign, jnp.float32)
    o_ref[...] = y_signed.astype(o_ref.dtype)


def _dimension_semantics(grid_size):
    """Semantics for the single (row-/chunk-) block grid axis.

    On v7x (2 TensorCores/chip) actually split blocks across cores with
    CORE_PARALLEL -- plain "parallel" is a codegen no-op.  Single-TC chips
    (v5e/v6e) and single-block grids keep the default.
    """
    if grid_size >= 2:
        try:
            kind = jax.devices()[0].device_kind.lower()
        except Exception:
            kind = ""
        if "v7" in kind:
            return (getattr(pltpu, "CORE_PARALLEL", "parallel"),)
    return ("parallel",)


def _compiler_params(grid_size):
    return pltpu.CompilerParams(
        dimension_semantics=_dimension_semantics(grid_size),
        vmem_limit_bytes=_VMEM_LIMIT_BYTES,
    )


def asinh_pallas(x):
    orig_shape = x.shape
    dtype = x.dtype
    n = x.size
    if n == 0:
        return x

    elem_bytes = jnp.dtype(dtype).itemsize

    # ---- lane-dense 2-D slab when the element count allows it --------------
    lanes = None
    for cand in _LANE_CHOICES:
        if n % cand == 0:
            lanes = cand
            break

    if lanes is not None:
        rows = n // lanes
        x2d = jnp.reshape(x, (rows, lanes))

        block_rows = max(8, _BLOCK_BYTES_TARGET // (lanes * elem_bytes))
        block_rows = (block_rows // 8) * 8              # sublane multiple of 8
        if block_rows >= rows:
            block_rows = rows                           # single block == full dims (legal)
            grid = 1
        else:
            grid = pl.cdiv(rows, block_rows)            # trailing partial block is masked

        out2d = pl.pallas_call(
            _asinh_kernel,
            out_shape=jax.ShapeDtypeStruct((rows, lanes), dtype),
            grid=(grid,),
            in_specs=[pl.BlockSpec((block_rows, lanes), lambda i: (i, 0))],
            out_specs=pl.BlockSpec((block_rows, lanes), lambda i: (i, 0)),
            compiler_params=_compiler_params(grid),
        )(x2d)
        return out2d.reshape(orig_shape)

    # ---- irregular size: flat view + masked tail block (no pad/slice) ------
    x_flat = jnp.reshape(x, (n,))
    block_len = max(1024, (_BLOCK_BYTES_TARGET // elem_bytes) // 1024 * 1024)
    if block_len >= n:
        block_len = n                                   # single full block (legal)
        grid = 1
    else:
        grid = pl.cdiv(n, block_len)                    # Pallas masks the tail block

    out_flat = pl.pallas_call(
        _asinh_kernel,
        out_shape=jax.ShapeDtypeStruct((n,), dtype),
        grid=(grid,),
        in_specs=[pl.BlockSpec((block_len,), lambda i: (i,))],
        out_specs=pl.BlockSpec((block_len,), lambda i: (i,)),
        compiler_params=_compiler_params(grid),
    )(x_flat)
    return out_flat.reshape(orig_shape)


if __name__ == "__main__":
    key = jax.random.PRNGKey(0)
    x = jax.random.normal(key, (2, 4, 16, 16), dtype=jnp.float32) * 3.0

    y = asinh_pallas(x)
    jax.block_until_ready(y)

    # sanity check against JAX reference
    y_ref = jnp.arcsinh(x)
    assert y.shape == x.shape and y.dtype == x.dtype
    max_err = float(jnp.max(jnp.abs(y - y_ref)))
    assert max_err < 1e-4, max_err

    print("KERNEL_OK")
</pallas_src>

<mosaic_0001>
module attributes {stable_mosaic.version = 11 : i64} {
  func.func @_asinh_kernel(%arg0: i32, %arg1: memref<1x2048xf32, #tpu.memory_space<vmem>>, %arg2: memref<1x2048xf32, #tpu.memory_space<vmem>>) attributes {dimension_semantics = [#tpu.dimension_semantics<parallel>], iteration_bounds = array<i64: 1>, scalar_prefetch = 0 : i64, scratch_operands = 0 : i64, tpu.core_type = #tpu.core_type<tc>, window_params = [{transform_indices = @transform_0, window_bounds = array<i64: 1, 2048>}, {transform_indices = @transform_1, window_bounds = array<i64: 1, 2048>}]} {
    %c0 = arith.constant 0 : index
    %c0_0 = arith.constant 0 : index
    %0 = vector.load %arg1[%c0, %c0_0] : memref<1x2048xf32, #tpu.memory_space<vmem>>, vector<1x2048xf32>
    %1 = math.absf %0 : vector<1x2048xf32>
    %2 = arith.mulf %1, %1 : vector<1x2048xf32>
    %cst = arith.constant 1.000000e+00 : f32
    %3 = vector.broadcast %cst : f32 to vector<1x2048xf32>
    %4 = arith.addf %2, %3 : vector<1x2048xf32>
    %5 = math.sqrt %4 : vector<1x2048xf32>
    %cst_1 = arith.constant 1.000000e+00 : f32
    %6 = vector.broadcast %cst_1 : f32 to vector<1x2048xf32>
    %7 = arith.subf %5, %6 : vector<1x2048xf32>
    %8 = arith.addf %1, %7 : vector<1x2048xf32>
    %cst_2 = arith.constant 2.000000e+00 : f32
    %9 = vector.broadcast %cst_2 : f32 to vector<1x2048xf32>
    %10 = arith.mulf %9, %1 : vector<1x2048xf32>
    %cst_3 = arith.constant 3.40282347E+38 : f32
    %11 = vector.broadcast %cst_3 : f32 to vector<1x2048xf32>
    %12 = arith.minimumf %10, %11 : vector<1x2048xf32>
    %cst_4 = arith.constant 9.99999984E+17 : f32
    %13 = vector.broadcast %cst_4 : f32 to vector<1x2048xf32>
    %14 = arith.cmpf ogt, %1, %13 : vector<1x2048xf32>
    %15 = arith.select %14, %12, %8 : vector<1x2048xi1>, vector<1x2048xf32>
    %16 = math.log1p %15 : vector<1x2048xf32>
    %17 = math.absf %1 : vector<1x2048xf32>
    %cst_5 = arith.constant 0x7F800000 : f32
    %18 = vector.broadcast %cst_5 : f32 to vector<1x2048xf32>
    %19 = arith.cmpf oeq, %17, %18 : vector<1x2048xf32>
    %20 = arith.select %19, %1, %16 : vector<1x2048xi1>, vector<1x2048xf32>
    %21 = tpu.bitcast %0 : vector<1x2048xf32> -> vector<1x2048xi32>
    %c-2147483648_i32 = arith.constant -2147483648 : i32
    %22 = vector.broadcast %c-2147483648_i32 : i32 to vector<1x2048xi32>
    %23 = arith.andi %21, %22 : vector<1x2048xi32>
    %24 = tpu.bitcast %20 : vector<1x2048xf32> -> vector<1x2048xi32>
    %25 = arith.ori %24, %23 : vector<1x2048xi32>
    %26 = tpu.bitcast %25 : vector<1x2048xi32> -> vector<1x2048xf32>
    %c0_6 = arith.constant 0 : index
    %c0_7 = arith.constant 0 : index
    %27 = vector.load %arg2[%c0_6, %c0_7] : memref<1x2048xf32, #tpu.memory_space<vmem>>, vector<1x2048xf32>
    tpu.vector_store %arg2[%c0_6, %c0_7], %26 {strides = array<i32>} : memref<1x2048xf32, #tpu.memory_space<vmem>>, vector<1x2048xf32>,
    return
  }
  func.func @transform_0(%arg0: i32) -> (i32, i32) {
    %c0_i32 = arith.constant 0 : i32
    %c0_i32_0 = arith.constant 0 : i32
    return %arg0, %c0_i32 : i32, i32
  }
  func.func @transform_1(%arg0: i32) -> (i32, i32) {
    %c0_i32 = arith.constant 0 : i32
    %c0_i32_0 = arith.constant 0 : i32
    return %arg0, %c0_i32 : i32, i32
  }
}

</mosaic_0001>

<llo_original>
// kernel: tpu_custom_call.1
$region0: #{tpu_custom_call.1}
  #allocation0 [shape = 'u32[]', space=smem, size = 0x4, offset = 0x4, fixed_abs, tag = 'smem constant byte address 0x4 - core index']
  #allocation1 [shape = 'u32[144,128]{1,0:T(1,128)}', space=vmem, size = 0x12000, scoped, tag = 'internal scratch']
  %s0 = inlined_call_operand.hbm [shape: f32[1,2048], index: 0, kind: input, shape index: {}]
  %s1 = inlined_call_operand.hbm [shape: f32[1,2048], index: 1, kind: output, shape index: {}]
  %s2 = sld [smem:[#allocation0]]
  $region18: #{tpu_custom_call.1} parent=0
    _
  %s4 = ssub.s32 1, %s2
  %s5 = scalar_select 0, %s4, %s2
  $region1: #{tpu_custom_call.1} parent=0
    #allocation2 [shape = 'u8[8192]{0}', space=vmem, size = 0x2000, scoped, tag = 'input window, operand 0, single buffered']
    #allocation3 [shape = 's32[1]{0}', space=sflag, size = 0x4, scoped, tag = 'scoped memory for tpu_custom_call.1']
    #allocation4 [shape = 's32[1]{0}', space=sflag, size = 0x4, scoped, tag = 'scoped memory for tpu_custom_call.1']
    #allocation5 [shape = 'u8[8192]{0}', space=vmem, size = 0x2000, scoped, tag = 'output window, operand 0, single buffered']
    %6 = vsyncpa [#allocation3], 0
    %7 = vsyncpa [#allocation4], 0
    // Predicated region
    $region2: #{tpu_custom_call.1} parent=1 // pred_check
      _
    $region3: #{tpu_custom_call.1} parent=1 // pred_check_branch
      %9 = sbr.rel (0) target = $region5
    $region4: #{tpu_custom_call.1} parent=1 // pred_region
      %s11 = ssub.s32 256, 256
      %12 = vsyncadd [#allocation3], %s11
      %s14 = sshll.u32 [#allocation2], 4
      %s15 = int_to_ptr.vmem [resolvable:$true] %s14
      %17 = dma.hbm_to_vmem [thread:$0]  %s0, 256, %s15, [#allocation3]
    $region5: #{tpu_custom_call.1} parent=1 // pred_fallthru
      _
    // Predicated region
    $region6: #{tpu_custom_call.1} parent=1 // pred_check
      _
    $region7: #{tpu_custom_call.1} parent=1 // pred_check_branch
      %19 = sbr.rel (0) target = $region9
    $region8: #{tpu_custom_call.1} parent=1 // pred_region
      %20 = dma.done [#allocation3], 256
    $region9: #{tpu_custom_call.1} parent=1 // pred_fallthru
      _
    %v21 = vld [vmem:[#allocation2] sm:$0xff]
    %v22 = vld [vmem:[#allocation2 + $0x8] sm:$0xff]
    %v23 = vand.u32 2147483647, %v21
    %v24 = vand.u32 2147483647, %v22
    %v25 = vmul.f32 %v23, %v23
    %v26 = vmul.f32 %v24, %v24
    %v27 = vadd.f32 %v25, 1.0
    %v28 = vadd.f32 %v26, 1.0
    %v29 = vrsqrt.pop %v27
    %v30 = vmul.f32 %v27, %v29
    %vm31 = vcmp.eq.f32.partialorder %v27, inf
    %v32 = vsel %vm31, %v27, %v30
    %vm33 = vcmp.eq.f32.partialorder %v27, 0.0
    %v34 = vand.u32 %v27, 2147483648
    %v35 = vsel %vm33, %v34, %v32
    %v36 = vrsqrt.pop %v28
    %v37 = vmul.f32 %v28, %v36
    %vm38 = vcmp.eq.f32.partialorder %v28, inf
    %v39 = vsel %vm38, %v28, %v37
    %vm40 = vcmp.eq.f32.partialorder %v28, 0.0
    %v41 = vand.u32 %v28, 2147483648
    %v42 = vsel %vm40, %v41, %v39
    %v43 = vsub.f32 %v35, 1.0
    %v44 = vsub.f32 %v42, 1.0
    %v45 = vadd.f32 %v23, %v43
    %v46 = vadd.f32 %v24, %v44
    %v47 = vmul.f32 %v23, 2.0
    %v48 = vmul.f32 %v24, 2.0
    %v49 = vmin.f32 %v47, 3.4028235e+38
    %v50 = vmin.f32 %v48, 3.4028235e+38
    %vm51 = vcmp.gt.f32.partialorder %v23, 1e+18
    %vm52 = vcmp.gt.f32.partialorder %v24, 1e+18
    %v53 = vsel %vm51, %v49, %v45
    %v54 = vsel %vm52, %v50, %v46
    %v55 = vadd.f32 %v53, 1.0
    %v56 = vlog2.pop %v55
    %v57 = vmul.f32 %v56, 0.6931472
    %v58 = vmul.f32 -0.5, %v53
    %v59 = vadd.f32 %v58, 1.0
    %v60 = vmul.f32 %v59, %v53
    %v61 = vand.u32 2147483647, %v53
    %vm62 = vcmp.lt.f32.partialorder %v61, 0.0004427343
    %v63 = vsel %vm62, %v60, %v57
    %v64 = vadd.f32 %v54, 1.0
    %v65 = vlog2.pop %v64
    %v66 = vmul.f32 %v65, 0.6931472
    %v67 = vmul.f32 -0.5, %v54
    %v68 = vadd.f32 %v67, 1.0
    %v69 = vmul.f32 %v68, %v54
    %v70 = vand.u32 2147483647, %v54
    %vm71 = vcmp.lt.f32.partialorder %v70, 0.0004427343
    %v72 = vsel %vm71, %v69, %v66
    %v73 = vand.u32 2147483647, %v23
    %v74 = vand.u32 2147483647, %v24
    %vm75 = vcmp.eq.f32.partialorder %v73, inf
    %vm76 = vcmp.eq.f32.partialorder %v74, inf
    %v77 = vsel %vm75, %v23, %v63
    %v78 = vsel %vm76, %v24, %v72
    %v81 = vlaneseq
    %v82 = vshrl.u32 %v81, 7
    %v83 = vsub.s32 0, %v82
    %v84 = vrot.slane %v21, %v83
    %v85 = vlaneseq
    %v86 = vshrl.u32 %v85, 7
    %v87 = vsub.s32 1, %v86
    %v88 = vrot.slane %v21, %v87
    %v89 = vlaneseq
    %v90 = vshrl.u32 %v89, 7
    %v91 = vsub.s32 2, %v90
    %v92 = vrot.slane %v21, %v91
    %v93 = vlaneseq
    %v94 = vshrl.u32 %v93, 7
    %v95 = vsub.s32 3, %v94
    %v96 = vrot.slane %v21, %v95
    %v97 = vlaneseq
    %v98 = vshrl.u32 %v97, 7
    %v99 = vsub.s32 4, %v98
    %v100 = vrot.slane %v21, %v99
    %v101 = vlaneseq
    %v102 = vshrl.u32 %v101, 7
    %v103 = vsub.s32 5, %v102
    %v104 = vrot.slane %v21, %v103
    %v105 = vlaneseq
    %v106 = vshrl.u32 %v105, 7
    %v107 = vsub.s32 6, %v106
    %v108 = vrot.slane %v21, %v107
    %v109 = vlaneseq
    %v110 = vshrl.u32 %v109, 7
    %v111 = vsub.s32 7, %v110
    %v112 = vrot.slane %v21, %v111
    %v113 = vlaneseq
    %v114 = vshrl.u32 %v113, 7
    %v115 = vsub.s32 0, %v114
    %v116 = vrot.slane %v22, %v115
    %v117 = vlaneseq
    %v118 = vshrl.u32 %v117, 7
    %v119 = vsub.s32 1, %v118
    %v120 = vrot.slane %v22, %v119
    %v121 = vlaneseq
    %v122 = vshrl.u32 %v121, 7
    %v123 = vsub.s32 2, %v122
    %v124 = vrot.slane %v22, %v123
    %v125 = vlaneseq
    %v126 = vshrl.u32 %v125, 7
    %v127 = vsub.s32 3, %v126
    %v128 = vrot.slane %v22, %v127
    %v129 = vlaneseq
    %v130 = vshrl.u32 %v129, 7
    %v131 = vsub.s32 4, %v130
    %v132 = vrot.slane %v22, %v131
    %v133 = vlaneseq
    %v134 = vshrl.u32 %v133, 7
    %v135 = vsub.s32 5, %v134
    %v136 = vrot.slane %v22, %v135
    %v137 = vlaneseq
    %v138 = vshrl.u32 %v137, 7
    %v139 = vsub.s32 6, %v138
    %v140 = vrot.slane %v22, %v139
    %v141 = vlaneseq
    %v142 = vshrl.u32 %v141, 7
    %v143 = vsub.s32 7, %v142
    %v144 = vrot.slane %v22, %v143
    %v145 = vand.u32 %v84, 2147483648
    %v146 = vand.u32 %v88, 2147483648
    %v147 = vand.u32 %v92, 2147483648
    %v148 = vand.u32 %v96, 2147483648
    %v149 = vand.u32 %v100, 2147483648
    %v150 = vand.u32 %v104, 2147483648
    %v151 = vand.u32 %v108, 2147483648
    %v152 = vand.u32 %v112, 2147483648
    %v153 = vand.u32 %v116, 2147483648
    %v154 = vand.u32 %v120, 2147483648
    %v155 = vand.u32 %v124, 2147483648
    %v156 = vand.u32 %v128, 2147483648
    %v157 = vand.u32 %v132, 2147483648
    %v158 = vand.u32 %v136, 2147483648
    %v159 = vand.u32 %v140, 2147483648
    %v160 = vand.u32 %v144, 2147483648
    %v163 = vlaneseq
    %v164 = vshrl.u32 %v163, 7
    %v165 = vsub.s32 0, %v164
    %v166 = vrot.slane %v77, %v165
    %v167 = vlaneseq
    %v168 = vshrl.u32 %v167, 7
    %v169 = vsub.s32 1, %v168
    %v170 = vrot.slane %v77, %v169
    %v171 = vlaneseq
    %v172 = vshrl.u32 %v171, 7
    %v173 = vsub.s32 2, %v172
    %v174 = vrot.slane %v77, %v173
    %v175 = vlaneseq
    %v176 = vshrl.u32 %v175, 7
    %v177 = vsub.s32 3, %v176
    %v178 = vrot.slane %v77, %v177
    %v179 = vlaneseq
    %v180 = vshrl.u32 %v179, 7
    %v181 = vsub.s32 4, %v180
    %v182 = vrot.slane %v77, %v181
    %v183 = vlaneseq
    %v184 = vshrl.u32 %v183, 7
    %v185 = vsub.s32 5, %v184
    %v186 = vrot.slane %v77, %v185
    %v187 = vlaneseq
    %v188 = vshrl.u32 %v187, 7
    %v189 = vsub.s32 6, %v188
    %v190 = vrot.slane %v77, %v189
    %v191 = vlaneseq
    %v192 = vshrl.u32 %v191, 7
    %v193 = vsub.s32 7, %v192
    %v194 = vrot.slane %v77, %v193
    %v195 = vlaneseq
    %v196 = vshrl.u32 %v195, 7
    %v197 = vsub.s32 0, %v196
    %v198 = vrot.slane %v78, %v197
    %v199 = vlaneseq
    %v200 = vshrl.u32 %v199, 7
    %v201 = vsub.s32 1, %v200
    %v202 = vrot.slane %v78, %v201
    %v203 = vlaneseq
    %v204 = vshrl.u32 %v203, 7
    %v205 = vsub.s32 2, %v204
    %v206 = vrot.slane %v78, %v205
    %v207 = vlaneseq
    %v208 = vshrl.u32 %v207, 7
    %v209 = vsub.s32 3, %v208
    %v210 = vrot.slane %v78, %v209
    %v211 = vlaneseq
    %v212 = vshrl.u32 %v211, 7
    %v213 = vsub.s32 4, %v212
    %v214 = vrot.slane %v78, %v213
    %v215 = vlaneseq
    %v216 = vshrl.u32 %v215, 7
    %v217 = vsub.s32 5, %v216
    %v218 = vrot.slane %v78, %v217
    %v219 = vlaneseq
    %v220 = vshrl.u32 %v219, 7
    %v221 = vsub.s32 6, %v220
    %v222 = vrot.slane %v78, %v221
    %v223 = vlaneseq
    %v224 = vshrl.u32 %v223, 7
    %v225 = vsub.s32 7, %v224
    %v226 = vrot.slane %v78, %v225
    %v227 = vor.u32 %v166, %v145
    %v228 = vor.u32 %v170, %v146
    %v229 = vor.u32 %v174, %v147
    %v230 = vor.u32 %v178, %v148
    %v231 = vor.u32 %v182, %v149
    %v232 = vor.u32 %v186, %v150
    %v233 = vor.u32 %v190, %v151
    %v234 = vor.u32 %v194, %v152
    %v235 = vor.u32 %v198, %v153
    %v236 = vor.u32 %v202, %v154
    %v237 = vor.u32 %v206, %v155
    %v238 = vor.u32 %v210, %v156
    %v239 = vor.u32 %v214, %v157
    %v240 = vor.u32 %v218, %v158
    %v241 = vor.u32 %v222, %v159
    %v242 = vor.u32 %v226, %v160
    %v243 = vcombine.low %v227, %v228
    %v244 = vcombine.low %v229, %v230
    %v245 = vcombine.low %v231, %v232
    %v246 = vcombine.low %v233, %v234
    %v248 = vunpack.c.l.s4 1966171168
    %v249 = vunpack.c.0.s8 %v248
    %v250 = vlaneseq
    %v251 = vshrl.u32 %v250, 7
    %v252 = vsub.s32 %v249, %v251
    %v253 = vrot.slane %v243, %v252
    %v255 = vunpack.c.l.s4 1966171168
    %v256 = vunpack.c.0.s8 %v255
    %v257 = vlaneseq
    %v258 = vshrl.u32 %v257, 7
    %v259 = vsub.s32 %v256, %v258
    %v260 = vrot.slane %v244, %v259
    %v262 = vunpack.c.l.s4 1966171168
    %v263 = vunpack.c.0.s8 %v262
    %v264 = vlaneseq
    %v265 = vshrl.u32 %v264, 7
    %v266 = vsub.s32 %v263, %v265
    %v267 = vrot.slane %v245, %v266
    %v269 = vunpack.c.l.s4 1966171168
    %v270 = vunpack.c.0.s8 %v269
    %v271 = vlaneseq
    %v272 = vshrl.u32 %v271, 7
    %v273 = vsub.s32 %v270, %v272
    %v274 = vrot.slane %v246, %v273
    %v275 = vcombine.low %v253, %v260
    %v276 = vcombine.low %v267, %v274
    %v278 = vunpack.c.l.s4 1966171168
    %v279 = vunpack.c.0.s8 %v278
    %v280 = vlaneseq
    %v281 = vshrl.u32 %v280, 7
    %v282 = vsub.s32 %v279, %v281
    %v283 = vrot.slane %v275, %v282
    %v285 = vunpack.c.l.s4 1966171168
    %v286 = vunpack.c.0.s8 %v285
    %v287 = vlaneseq
    %v288 = vshrl.u32 %v287, 7
    %v289 = vsub.s32 %v286, %v288
    %v290 = vrot.slane %v276, %v289
    %v291 = vcombine.low %v283, %v290
    %v292 = vcombine.low %v235, %v236
    %v293 = vcombine.low %v237, %v238
    %v294 = vcombine.low %v239, %v240
    %v295 = vcombine.low %v241, %v242
    %v297 = vunpack.c.l.s4 1966171168
    %v298 = vunpack.c.0.s8 %v297
    %v299 = vlaneseq
    %v300 = vshrl.u32 %v299, 7
    %v301 = vsub.s32 %v298, %v300
    %v302 = vrot.slane %v292, %v301
    %v304 = vunpack.c.l.s4 1966171168
    %v305 = vunpack.c.0.s8 %v304
    %v306 = vlaneseq
    %v307 = vshrl.u32 %v306, 7
    %v308 = vsub.s32 %v305, %v307
    %v309 = vrot.slane %v293, %v308
    %v311 = vunpack.c.l.s4 1966171168
    %v312 = vunpack.c.0.s8 %v311
    %v313 = vlaneseq
    %v314 = vshrl.u32 %v313, 7
    %v315 = vsub.s32 %v312, %v314
    %v316 = vrot.slane %v294, %v315
    %v318 = vunpack.c.l.s4 1966171168
    %v319 = vunpack.c.0.s8 %v318
    %v320 = vlaneseq
    %v321 = vshrl.u32 %v320, 7
    %v322 = vsub.s32 %v319, %v321
    %v323 = vrot.slane %v295, %v322
    %v324 = vcombine.low %v302, %v309
    %v325 = vcombine.low %v316, %v323
    %v327 = vunpack.c.l.s4 1966171168
    %v328 = vunpack.c.0.s8 %v327
    %v329 = vlaneseq
    %v330 = vshrl.u32 %v329, 7
    %v331 = vsub.s32 %v328, %v330
    %v332 = vrot.slane %v324, %v331
    %v334 = vunpack.c.l.s4 1966171168
    %v335 = vunpack.c.0.s8 %v334
    %v336 = vlaneseq
    %v337 = vshrl.u32 %v336, 7
    %v338 = vsub.s32 %v335, %v337
    %v339 = vrot.slane %v325, %v338
    %v340 = vcombine.low %v332, %v339
    %343 = vst [vmem:[#allocation5] sm:$0xff] %v291
    %344 = vst [vmem:[#allocation5 + $0x8] sm:$0xff] %v340
    // Predicated region
    $region10: #{tpu_custom_call.1} parent=1 // pred_check
      _
    $region11: #{tpu_custom_call.1} parent=1 // pred_check_branch
      %346 = sbr.rel (0) target = $region13
    $region12: #{tpu_custom_call.1} parent=1 // pred_region
      %s348 = ssub.s32 256, 256
      %349 = vsyncadd [#allocation4], %s348
      %s351 = sshll.u32 [#allocation5], 4
      %s352 = int_to_ptr.vmem [resolvable:$true] %s351
      %354 = dma.vmem_to_hbm [thread:$0]  %s352, 256, %s1, [#allocation4]
    $region13: #{tpu_custom_call.1} parent=1 // pred_fallthru
      _
    // Predicated region
    $region14: #{tpu_custom_call.1} parent=1 // pred_check
      _
    $region15: #{tpu_custom_call.1} parent=1 // pred_check_branch
      %356 = sbr.rel (0) target = $region17
    $region16: #{tpu_custom_call.1} parent=1 // pred_region
      %357 = dma.done [#allocation4], 256
    $region17: #{tpu_custom_call.1} parent=1 // pred_fallthru
      _
    %358 = vsyncpa [#allocation3], 1
    %359 = vsyncpa [#allocation4], 1

</llo_original>
